<compile_context>
chip_gen: v7x
topology: tpu7x:2x2x1
jax: 0.10.0
libtpu: 0.0.40
codegen_flags: <defaults>
</compile_context>

<pallas_src>
import functools

import jax
import jax.numpy as jnp
from jax import lax
from jax.experimental import pallas as pl
from jax.experimental.pallas import tpu as pltpu


def _round_up(a: int, b: int) -> int:
    return ((a + b - 1) // b) * b


def _dice_reduce_kernel(x_ref, y_ref, xy_ref, xpy_ref, *, acc_w, n_sub):
    """Accumulate per-row partial sums of x*y and x+y over one lane tile.

    x_ref, y_ref : (R, TILE) input tiles (any float dtype, widened to f32)
    xy_ref       : (R, ACC_W) resident output accumulator for sum(x*y)
    xpy_ref      : (R, ACC_W) resident output accumulator for sum(x)+sum(y)
    """
    k = pl.program_id(0)

    @pl.when(k == 0)
    def _():
        xy_ref[...] = jnp.zeros_like(xy_ref)
        xpy_ref[...] = jnp.zeros_like(xpy_ref)

    def body(i, carry):
        acc_xy, acc_xpy = carry
        off = pl.multiple_of(i * acc_w, acc_w)
        x = x_ref[:, pl.ds(off, acc_w)].astype(jnp.float32)
        y = y_ref[:, pl.ds(off, acc_w)].astype(jnp.float32)
        return acc_xy + x * y, acc_xpy + (x + y)

    zeros = jnp.zeros(xy_ref.shape, jnp.float32)
    acc_xy, acc_xpy = lax.fori_loop(
        0, n_sub, body, (zeros, zeros), unroll=min(n_sub, 8))

    # One accumulator read-modify-write per grid step (not per element).
    xy_ref[...] += acc_xy
    xpy_ref[...] += acc_xpy


@functools.partial(jax.jit, static_argnames=("target_block_bytes", "acc_w_max"))
def dice_loss(x, y, *, target_block_bytes=1 << 20, acc_w_max=512):
    """x, y: float arrays of shape (N, C, H, W).  Returns scalar dice loss."""
    N, C, H, W = x.shape
    R = N * C
    HW = H * W
    itemsize = max(jnp.dtype(x.dtype).itemsize, jnp.dtype(y.dtype).itemsize)

    # ---- Tile selection: big lane tiles derived from an HBM byte budget. ----
    hw128 = _round_up(HW, 128)
    if hw128 <= acc_w_max:
        acc_w = hw128
        tile = hw128
        steps = 1
    else:
        acc_w = acc_w_max
        tile_target = max(
            acc_w, (target_block_bytes // (R * itemsize)) // acc_w * acc_w)
        hw_acc = _round_up(HW, acc_w)
        if hw_acc <= tile_target:
            tile, steps = hw_acc, 1
        else:
            steps = -(-hw_acc // tile_target)           # cdiv
            tile = _round_up(-(-HW // steps), acc_w)
    padded_hw = tile * steps
    n_sub = tile // acc_w

    # NCHW -> (R, HW): contiguous reshape (no transpose).  Zero-pad the lane
    # axis up to the tile multiple if needed (zeros add exactly 0 to both
    # accumulated sums, so the result is exact).
    x_r = x.reshape(R, HW)
    y_r = y.reshape(R, HW)
    if padded_hw != HW:
        pad = padded_hw - HW
        x_r = jnp.pad(x_r, ((0, 0), (0, pad)))
        y_r = jnp.pad(y_r, ((0, 0), (0, pad)))

    kernel = functools.partial(_dice_reduce_kernel, acc_w=acc_w, n_sub=n_sub)

    out_xy, out_xpy = pl.pallas_call(
        kernel,
        out_shape=(jax.ShapeDtypeStruct((R, acc_w), jnp.float32),
                   jax.ShapeDtypeStruct((R, acc_w), jnp.float32)),
        grid_spec=pltpu.PrefetchScalarGridSpec(
            num_scalar_prefetch=0,
            grid=(steps,),
            in_specs=[
                pl.BlockSpec((R, tile), lambda k: (0, k)),
                pl.BlockSpec((R, tile), lambda k: (0, k)),
            ],
            out_specs=[
                pl.BlockSpec((R, acc_w), lambda k: (0, 0)),
                pl.BlockSpec((R, acc_w), lambda k: (0, 0)),
            ],
        ),
        compiler_params=pltpu.CompilerParams(
            dimension_semantics=("arbitrary",),
        ),
    )(x_r, y_r)
    # TODO(synk): on v7x, shard `steps` across the two TensorCores
    # (pltpu.CORE_PARALLEL / pl.core_map) for ~2x on this HBM-bound kernel.

    # Tiny final reductions + dice formula outside the kernel.
    tp = jnp.sum(out_xy.reshape(N, C, acc_w), axis=(0, 2))      # sum(x*y) per channel
    sxpy = jnp.sum(out_xpy.reshape(N, C, acc_w), axis=(0, 2))   # sum(x)+sum(y) per channel

    nominator = 2.0 * tp + 1e-05
    denominator = sxpy + 1e-05          # == 2*tp + fp + fn
    dice_score = -(nominator / (denominator + 1e-08))           # (C,)

    # Options().opts.dice_weights is None in this setup -> uniform 1/C weights
    # followed by mean, exactly as the PyTorch forward does.
    # TODO(synk): plumb through configurable dice_weights if needed.
    weights = jnp.full((C,), 1.0 / C, dtype=jnp.float32)
    return jnp.mean(weights * dice_score)


def _dice_loss_ref(x, y):
    """Pure-JAX reference matching the PyTorch forward exactly."""
    tp = jnp.sum(x * y, axis=(0, 2, 3))
    fp = jnp.sum(x * (1.0 - y), axis=(0, 2, 3))
    fn = jnp.sum((1.0 - x) * y, axis=(0, 2, 3))
    nominator = 2.0 * tp + 1e-05
    denominator = 2.0 * tp + fp + fn + 1e-05
    dice_score = -(nominator / (denominator + 1e-08))
    C = dice_score.shape[0]
    weights = jnp.full((C,), 1.0 / C, dtype=jnp.float32)
    return jnp.mean(weights * dice_score)


if __name__ == "__main__":
    key = jax.random.PRNGKey(0)
    kx, ky = jax.random.split(key)

    N, C, H, W = 2, 4, 16, 16
    x = jax.random.uniform(kx, (N, C, H, W), dtype=jnp.float32)           # predicted probs
    y = (jax.random.uniform(ky, (N, C, H, W)) > 0.5).astype(jnp.float32)  # binary labels

    out = jax.block_until_ready(dice_loss(x, y))
    ref = jax.block_until_ready(_dice_loss_ref(x, y))

    assert jnp.allclose(out, ref, rtol=1e-5, atol=1e-6), (out, ref)
    print("KERNEL_OK")
</pallas_src>

<mosaic_0001>
module attributes {stable_mosaic.version = 11 : i64} {
  func.func @_dice_reduce_kernel(%arg0: i32, %arg1: memref<8x256xf32, #tpu.memory_space<vmem>>, %arg2: memref<8x256xf32, #tpu.memory_space<vmem>>, %arg3: memref<8x256xf32, #tpu.memory_space<vmem>>, %arg4: memref<8x256xf32, #tpu.memory_space<vmem>>) attributes {dimension_semantics = [#tpu.dimension_semantics<arbitrary>], iteration_bounds = array<i64: 1>, scalar_prefetch = 0 : i64, scratch_operands = 0 : i64, tpu.core_type = #tpu.core_type<tc>, window_params = [{transform_indices = @transform_0, window_bounds = array<i64: 8, 256>}, {transform_indices = @transform_1, window_bounds = array<i64: 8, 256>}, {pipeline_mode = #tpu.pipeline_mode<synchronous>, transform_indices = @transform_2, window_bounds = array<i64: 8, 256>}, {pipeline_mode = #tpu.pipeline_mode<synchronous>, transform_indices = @transform_3, window_bounds = array<i64: 8, 256>}]} {
    %c0_i32 = arith.constant 0 : i32
    %0 = arith.cmpi eq, %arg0, %c0_i32 : i32
    %1 = arith.extui %0 : i1 to i32
    %c0_i32_0 = arith.constant 0 : i32
    %2 = arith.cmpi ne, %1, %c0_i32_0 : i32
    scf.if %2 {
      %cst_11 = arith.constant 0.000000e+00 : f32
      %20 = vector.broadcast %cst_11 : f32 to vector<8x256xf32>
      %c0_12 = arith.constant 0 : index
      %c0_13 = arith.constant 0 : index
      %21 = vector.load %arg3[%c0_12, %c0_13] : memref<8x256xf32, #tpu.memory_space<vmem>>, vector<8x256xf32>
      tpu.vector_store %arg3[%c0_12, %c0_13], %20 {strides = array<i32>} : memref<8x256xf32, #tpu.memory_space<vmem>>, vector<8x256xf32>,
      %cst_14 = arith.constant 0.000000e+00 : f32
      %22 = vector.broadcast %cst_14 : f32 to vector<8x256xf32>
      %c0_15 = arith.constant 0 : index
      %c0_16 = arith.constant 0 : index
      %23 = vector.load %arg4[%c0_15, %c0_16] : memref<8x256xf32, #tpu.memory_space<vmem>>, vector<8x256xf32>
      tpu.vector_store %arg4[%c0_15, %c0_16], %22 {strides = array<i32>} : memref<8x256xf32, #tpu.memory_space<vmem>>, vector<8x256xf32>,
    } else {
    }
    %cst = arith.constant 0.000000e+00 : f32
    %3 = vector.broadcast %cst : f32 to vector<8x256xf32>
    %c0_i32_1 = arith.constant 0 : i32
    %c256_i32 = arith.constant 256 : i32
    %4 = arith.muli %c0_i32_1, %c256_i32 : i32
    %5 = tpu.assume_multiple %4, 256 : i32
    %c0 = arith.constant 0 : index
    %6 = arith.index_cast %5 : i32 to index
    %7 = vector.load %arg1[%c0, %6] : memref<8x256xf32, #tpu.memory_space<vmem>>, vector<8x256xf32>
    %c0_2 = arith.constant 0 : index
    %8 = arith.index_cast %5 : i32 to index
    %9 = vector.load %arg2[%c0_2, %8] : memref<8x256xf32, #tpu.memory_space<vmem>>, vector<8x256xf32>
    %10 = arith.mulf %7, %9 : vector<8x256xf32>
    %11 = arith.addf %3, %10 : vector<8x256xf32>
    %12 = arith.addf %7, %9 : vector<8x256xf32>
    %13 = arith.addf %3, %12 : vector<8x256xf32>
    %c1_i32 = arith.constant 1 : i32
    %c0_3 = arith.constant 0 : index
    %c0_4 = arith.constant 0 : index
    %14 = vector.load %arg3[%c0_3, %c0_4] : memref<8x256xf32, #tpu.memory_space<vmem>>, vector<8x256xf32>
    %15 = arith.addf %14, %11 : vector<8x256xf32>
    %c0_5 = arith.constant 0 : index
    %c0_6 = arith.constant 0 : index
    %16 = vector.load %arg3[%c0_5, %c0_6] : memref<8x256xf32, #tpu.memory_space<vmem>>, vector<8x256xf32>
    tpu.vector_store %arg3[%c0_5, %c0_6], %15 {strides = array<i32>} : memref<8x256xf32, #tpu.memory_space<vmem>>, vector<8x256xf32>,
    %c0_7 = arith.constant 0 : index
    %c0_8 = arith.constant 0 : index
    %17 = vector.load %arg4[%c0_7, %c0_8] : memref<8x256xf32, #tpu.memory_space<vmem>>, vector<8x256xf32>
    %18 = arith.addf %17, %13 : vector<8x256xf32>
    %c0_9 = arith.constant 0 : index
    %c0_10 = arith.constant 0 : index
    %19 = vector.load %arg4[%c0_9, %c0_10] : memref<8x256xf32, #tpu.memory_space<vmem>>, vector<8x256xf32>
    tpu.vector_store %arg4[%c0_9, %c0_10], %18 {strides = array<i32>} : memref<8x256xf32, #tpu.memory_space<vmem>>, vector<8x256xf32>,
    return
  }
  func.func @transform_0(%arg0: i32) -> (i32, i32) {
    %c0_i32 = arith.constant 0 : i32
    %c0_i32_0 = arith.constant 0 : i32
    return %c0_i32, %arg0 : i32, i32
  }
  func.func @transform_1(%arg0: i32) -> (i32, i32) {
    %c0_i32 = arith.constant 0 : i32
    %c0_i32_0 = arith.constant 0 : i32
    return %c0_i32, %arg0 : i32, i32
  }
  func.func @transform_2(%arg0: i32) -> (i32, i32) {
    %c0_i32 = arith.constant 0 : i32
    %c0_i32_0 = arith.constant 0 : i32
    %c0_i32_1 = arith.constant 0 : i32
    return %c0_i32, %c0_i32_0 : i32, i32
  }
  func.func @transform_3(%arg0: i32) -> (i32, i32) {
    %c0_i32 = arith.constant 0 : i32
    %c0_i32_0 = arith.constant 0 : i32
    %c0_i32_1 = arith.constant 0 : i32
    return %c0_i32, %c0_i32_0 : i32, i32
  }
}

</mosaic_0001>

<llo_original>
// kernel: dice_loss.1
$region0: #{dice_loss.1}
  #allocation0 [shape = 'u32[]', space=smem, size = 0x4, offset = 0x4, fixed_abs, tag = 'smem constant byte address 0x4 - core index']
  #allocation1 [shape = 'u32[144,128]{1,0:T(1,128)}', space=vmem, size = 0x12000, scoped, tag = 'internal scratch']
  %s0 = inlined_call_operand.vmem [shape: f32[8,256], index: 0, kind: input, shape index: {}]
  %s1 = inlined_call_operand.vmem [shape: f32[8,256], index: 1, kind: input, shape index: {}]
  %s2 = inlined_call_operand.vmem [shape: f32[8,256], index: 2, kind: output, shape index: {0}]
  %s3 = inlined_call_operand.vmem [shape: f32[8,256], index: 3, kind: output, shape index: {1}]
  %4 = xla_tuple %s2, %s3
  %s5 = sld [smem:[#allocation0]]
  $region30: #{dice_loss.1} parent=0
    _
  %s7 = ssub.s32 1, %s5
  %s8 = scalar_select 0, %s7, %s5
  // Predicated region
  $region2: #{dice_loss.1} parent=0 // pred_check
    _
  $region3: #{dice_loss.1} parent=0 // pred_check_branch
    %10 = sbr.rel (0) target = $region5
  $region4: #{dice_loss.1} parent=0 // pred_region
    _
  $region5: #{dice_loss.1} parent=0 // pred_fallthru
    _
  // Predicated region
  $region6: #{dice_loss.1} parent=0 // pred_check
    _
  $region7: #{dice_loss.1} parent=0 // pred_check_branch
    %12 = sbr.rel (0) target = $region9
  $region8: #{dice_loss.1} parent=0 // pred_region
    _
  $region9: #{dice_loss.1} parent=0 // pred_fallthru
    _
  %p13 = scmp.eq.s32.totalorder 0, 0
  // Predicated region
  $region10: #{dice_loss.1} parent=0 // pred_check
    %p14 = pneg %p13
  $region11: #{dice_loss.1} parent=0 // pred_check_branch
    %16 = sbr.rel (%p14) target = $region13
  $region12: #{dice_loss.1} parent=0 // pred_region
    %17 = vst [vmem:[%s2] sm:$0xff] 0.0
    %18 = vst [vmem:[%s2 + $0x8] sm:$0xff] 0.0
    %19 = vst [vmem:[%s3] sm:$0xff] 0.0
    %20 = vst [vmem:[%s3 + $0x8] sm:$0xff] 0.0
  $region13: #{dice_loss.1} parent=0 // pred_fallthru
    _
  %v21 = vld [vmem:[%s0] sm:$0xff]
  %v22 = vld [vmem:[%s0 + $0x8] sm:$0xff]
  %v23 = vld [vmem:[%s1] sm:$0xff]
  %v24 = vld [vmem:[%s1 + $0x8] sm:$0xff]
  %v25 = vmul.f32 %v21, %v23
  %v26 = vmul.f32 %v22, %v24
  %v27 = vadd.f32 %v25, 0.0
  %v28 = vadd.f32 %v26, 0.0
  %v29 = vadd.f32 %v21, %v23
  %v30 = vadd.f32 %v22, %v24
  %v31 = vadd.f32 %v29, 0.0
  %v32 = vadd.f32 %v30, 0.0
  %v33 = vld [vmem:[%s2] sm:$0xff]
  %v34 = vld [vmem:[%s2 + $0x8] sm:$0xff]
  %v35 = vadd.f32 %v33, %v27
  %v36 = vadd.f32 %v34, %v28
  %37 = vst [vmem:[%s2] sm:$0xff] %v35
  %38 = vst [vmem:[%s2 + $0x8] sm:$0xff] %v36
  %v39 = vld [vmem:[%s3] sm:$0xff]
  %v40 = vld [vmem:[%s3 + $0x8] sm:$0xff]
  %v41 = vadd.f32 %v39, %v31
  %v42 = vadd.f32 %v40, %v32
  %43 = vst [vmem:[%s3] sm:$0xff] %v41
  %44 = vst [vmem:[%s3 + $0x8] sm:$0xff] %v42
  // Predicated region
  $region14: #{dice_loss.1} parent=0 // pred_check
    _
  $region15: #{dice_loss.1} parent=0 // pred_check_branch
    %46 = sbr.rel (0) target = $region17
  $region16: #{dice_loss.1} parent=0 // pred_region
    _
  $region17: #{dice_loss.1} parent=0 // pred_fallthru
    _
  // Predicated region
  $region18: #{dice_loss.1} parent=0 // pred_check
    _
  $region19: #{dice_loss.1} parent=0 // pred_check_branch
    %48 = sbr.rel (0) target = $region21
  $region20: #{dice_loss.1} parent=0 // pred_region
    _
  $region21: #{dice_loss.1} parent=0 // pred_fallthru
    _
  // Predicated region
  $region22: #{dice_loss.1} parent=0 // pred_check
    _
  $region23: #{dice_loss.1} parent=0 // pred_check_branch
    %50 = sbr.rel (0) target = $region25
  $region24: #{dice_loss.1} parent=0 // pred_region
    _
  $region25: #{dice_loss.1} parent=0 // pred_fallthru
    _
  // Predicated region
  $region26: #{dice_loss.1} parent=0 // pred_check
    _
  $region27: #{dice_loss.1} parent=0 // pred_check_branch
    %52 = sbr.rel (0) target = $region29
  $region28: #{dice_loss.1} parent=0 // pred_region
    _
  $region29: #{dice_loss.1} parent=0 // pred_fallthru
    _

</llo_original>
